<compile_context>
chip_gen: v6e
topology: v6e:2x2x1
jax: 0.10.0
libtpu: 0.0.40
codegen_flags: <defaults>
</compile_context>

<pallas_src>
import jax
import jax.numpy as jnp
from jax.experimental import pallas as pl
from jax.experimental.pallas import tpu as pltpu


def _dual_mm_kernel(x1_ref, x2_ref, x3_ref, x4_ref, o_ref):
    # Two MXU matmuls with f32 accumulation, summed on the VPU.
    # Matches torch.mm(x1, x2) + torch.mm(x3, x4) accumulation order.
    o_ref[...] = (
        jnp.dot(x1_ref[...], x2_ref[...], preferred_element_type=jnp.float32)
        + jnp.dot(x3_ref[...], x4_ref[...], preferred_element_type=jnp.float32)
    )


@jax.jit
def dual_mm_add(x1, x2, x3, x4):
    M, K = x1.shape
    K2, N = x2.shape
    assert K == K2 and x3.shape == (M, K) and x4.shape == (K, N)

    # Advisory cost estimate: 2 GEMMs of (M,K)x(K,N) + the elementwise add.
    flops = 2 * (2 * M * K * N) + M * N
    bytes_accessed = 4 * (2 * M * K + 2 * K * N + M * N)  # f32 in/out
    cost = pl.CostEstimate(
        flops=flops, transcendentals=0, bytes_accessed=bytes_accessed
    )

    vmem = pltpu.MemorySpace.VMEM
    return pl.pallas_call(
        _dual_mm_kernel,
        out_shape=jax.ShapeDtypeStruct((M, N), jnp.float32),
        # Gridless call: tiny operands (< 4 KiB total) live whole in VMEM;
        # no grid-loop bookkeeping, no redundant double-buffering.
        in_specs=[
            pl.BlockSpec(memory_space=vmem),
            pl.BlockSpec(memory_space=vmem),
            pl.BlockSpec(memory_space=vmem),
            pl.BlockSpec(memory_space=vmem),
        ],
        out_specs=pl.BlockSpec(memory_space=vmem),
        cost_estimate=cost,
    )(x1, x2, x3, x4)


if __name__ == "__main__":
    key = jax.random.PRNGKey(0)
    k1, k2, k3, k4 = jax.random.split(key, 4)

    # Shapes from the PyTorch module: (1, 65) @ (65, 5), twice, then add.
    x1 = jax.random.normal(k1, (1, 65), dtype=jnp.float32)
    x2 = jax.random.normal(k2, (65, 5), dtype=jnp.float32)
    x3 = jax.random.normal(k3, (1, 65), dtype=jnp.float32)
    x4 = jax.random.normal(k4, (65, 5), dtype=jnp.float32)

    out = dual_mm_add(x1, x2, x3, x4)
    jax.block_until_ready(out)

    # Reference check in plain JAX (same semantics as torch.mm + torch.mm + add)
    ref = x1 @ x2 + x3 @ x4
    assert out.shape == (1, 5)
    assert jnp.allclose(out, ref, atol=1e-4, rtol=1e-4)

    print("KERNEL_OK")
</pallas_src>

<mosaic_0001>
module attributes {stable_mosaic.version = 11 : i64} {
  func.func @_dual_mm_kernel(%arg0: memref<1x65xf32, #tpu.memory_space<vmem>>, %arg1: memref<65x5xf32, #tpu.memory_space<vmem>>, %arg2: memref<1x65xf32, #tpu.memory_space<vmem>>, %arg3: memref<65x5xf32, #tpu.memory_space<vmem>>, %arg4: memref<1x5xf32, #tpu.memory_space<vmem>>) attributes {dimension_semantics = [], scalar_prefetch = 0 : i64, scratch_operands = 0 : i64, tpu.core_type = #tpu.core_type<tc>} {
    %c0 = arith.constant 0 : index
    %c0_0 = arith.constant 0 : index
    %0 = vector.load %arg0[%c0, %c0_0] : memref<1x65xf32, #tpu.memory_space<vmem>>, vector<1x65xf32>
    %c0_1 = arith.constant 0 : index
    %c0_2 = arith.constant 0 : index
    %1 = vector.load %arg1[%c0_1, %c0_2] : memref<65x5xf32, #tpu.memory_space<vmem>>, vector<65x5xf32>
    %cst = arith.constant dense<0.000000e+00> : vector<1x5xf32>
    %2 = tpu.matmul %0, %1, %cst {dimension_numbers = #tpu.dot_dimension_numbers<[1], [0], [0], [1], [0, 0, 1, 1], [], []>} : vector<1x65xf32>, vector<65x5xf32>, vector<1x5xf32> -> vector<1x5xf32>
    %c0_3 = arith.constant 0 : index
    %c0_4 = arith.constant 0 : index
    %3 = vector.load %arg2[%c0_3, %c0_4] : memref<1x65xf32, #tpu.memory_space<vmem>>, vector<1x65xf32>
    %c0_5 = arith.constant 0 : index
    %c0_6 = arith.constant 0 : index
    %4 = vector.load %arg3[%c0_5, %c0_6] : memref<65x5xf32, #tpu.memory_space<vmem>>, vector<65x5xf32>
    %cst_7 = arith.constant dense<0.000000e+00> : vector<1x5xf32>
    %5 = tpu.matmul %3, %4, %cst_7 {dimension_numbers = #tpu.dot_dimension_numbers<[1], [0], [0], [1], [0, 0, 1, 1], [], []>} : vector<1x65xf32>, vector<65x5xf32>, vector<1x5xf32> -> vector<1x5xf32>
    %6 = arith.addf %2, %5 : vector<1x5xf32>
    %c0_8 = arith.constant 0 : index
    %c0_9 = arith.constant 0 : index
    %7 = vector.load %arg4[%c0_8, %c0_9] : memref<1x5xf32, #tpu.memory_space<vmem>>, vector<1x5xf32>
    tpu.vector_store %arg4[%c0_8, %c0_9], %6 {strides = array<i32>} : memref<1x5xf32, #tpu.memory_space<vmem>>, vector<1x5xf32>,
    return
  }
}

</mosaic_0001>

<llo_original>
// kernel: dual_mm_add.1
$region0: #{dual_mm_add.1}
  #allocation0 [shape = 'u32[]', space=smem, size = 0x4, offset = 0x4, fixed_abs, tag = 'smem constant byte address 0x4 - core index']
  #allocation1 [shape = 'u32[144,128]{1,0:T(1,128)}', space=vmem, size = 0x12000, scoped, tag = 'internal scratch']
  %s0 = inlined_call_operand.vmem [shape: f32[1,65], index: 0, kind: input, shape index: {}]
  %s1 = inlined_call_operand.vmem [shape: f32[65,5], index: 1, kind: input, shape index: {}]
  %s2 = inlined_call_operand.vmem [shape: f32[1,65], index: 2, kind: input, shape index: {}]
  %s3 = inlined_call_operand.vmem [shape: f32[65,5], index: 3, kind: input, shape index: {}]
  %s4 = inlined_call_operand.hbm [shape: f32[1,5], index: 4, kind: output, shape index: {}]
  %s5 = sld [smem:[#allocation0]]
  $region26: #{dual_mm_add.1} parent=0
    _
  %s7 = ssub.s32 1, %s5
  %s8 = scalar_select 0, %s7, %s5
  $region1: #{dual_mm_add.1} parent=0
    #allocation2 [shape = 'u8[512]{0}', space=vmem, size = 0x400, scoped, tag = 'output window, operand 0, single buffered']
    #allocation3 [shape = 's32[1]{0}', space=sflag, size = 0x4, scoped, tag = 'scoped memory for dual_mm_add.1']
    %9 = vsyncpa [#allocation3], 0
    // Predicated region
    $region2: #{dual_mm_add.1} parent=1 // pred_check
      _
    $region3: #{dual_mm_add.1} parent=1 // pred_check_branch
      %11 = sbr.rel (0) target = $region5
    $region4: #{dual_mm_add.1} parent=1 // pred_region
      _
    $region5: #{dual_mm_add.1} parent=1 // pred_fallthru
      _
    // Predicated region
    $region6: #{dual_mm_add.1} parent=1 // pred_check
      _
    $region7: #{dual_mm_add.1} parent=1 // pred_check_branch
      %13 = sbr.rel (0) target = $region9
    $region8: #{dual_mm_add.1} parent=1 // pred_region
      _
    $region9: #{dual_mm_add.1} parent=1 // pred_fallthru
      _
    // Predicated region
    $region10: #{dual_mm_add.1} parent=1 // pred_check
      _
    $region11: #{dual_mm_add.1} parent=1 // pred_check_branch
      %15 = sbr.rel (0) target = $region13
    $region12: #{dual_mm_add.1} parent=1 // pred_region
      _
    $region13: #{dual_mm_add.1} parent=1 // pred_fallthru
      _
    // Predicated region
    $region14: #{dual_mm_add.1} parent=1 // pred_check
      _
    $region15: #{dual_mm_add.1} parent=1 // pred_check_branch
      %17 = sbr.rel (0) target = $region17
    $region16: #{dual_mm_add.1} parent=1 // pred_region
      _
    $region17: #{dual_mm_add.1} parent=1 // pred_fallthru
      _
    %v18 = vld [vmem:[%s0] sm:$0x1]
    %v19 = vld [vmem:[%s1] sm:$0xff]
    %v20 = vld [vmem:[%s1 + $0x8] sm:$0xff]
    %v21 = vld [vmem:[%s1 + $0x10] sm:$0xff]
    %v22 = vld [vmem:[%s1 + $0x18] sm:$0xff]
    %v23 = vld [vmem:[%s1 + $0x20] sm:$0xff]
    %v24 = vld [vmem:[%s1 + $0x28] sm:$0xff]
    %v25 = vld [vmem:[%s1 + $0x30] sm:$0xff]
    %v26 = vld [vmem:[%s1 + $0x38] sm:$0xff]
    %v27 = vld [vmem:[%s1 + $0x40] sm:$0x1]
    %v28 = vld [vmem:[%s2] sm:$0x1]
    %v29 = vld [vmem:[%s3] sm:$0xff]
    %v30 = vld [vmem:[%s3 + $0x8] sm:$0xff]
    %v31 = vld [vmem:[%s3 + $0x10] sm:$0xff]
    %v32 = vld [vmem:[%s3 + $0x18] sm:$0xff]
    %v33 = vld [vmem:[%s3 + $0x20] sm:$0xff]
    %v34 = vld [vmem:[%s3 + $0x28] sm:$0xff]
    %v35 = vld [vmem:[%s3 + $0x30] sm:$0xff]
    %v36 = vld [vmem:[%s3 + $0x38] sm:$0xff]
    %v37 = vld [vmem:[%s3 + $0x40] sm:$0x1]
    %vm38 = vcmask 531456
    %v40 = vsel %vm38, %v28, 0
    %vm42 = vcmask 1040384
    %v44 = vsel %vm42, %v37, 0
    %46 = vmatprep.subr.mxu0 0.0
    %47 = vmatpush1.msra.mxu0 0.0
    %48 = vmatprep.subr.mxu0 0.0
    %49 = vmatpush1.msra.mxu0 0.0
    %50 = vmatprep.subr.mxu0 0.0
    %51 = vmatpush1.msra.mxu0 0.0
    %52 = vmatprep.subr.mxu0 0.0
    %53 = vmatpush1.msra.mxu0 0.0
    %54 = vmatprep.subr.mxu0 0.0
    %55 = vmatpush1.msra.mxu0 0.0
    %56 = vmatprep.subr.mxu0 0.0
    %57 = vmatpush1.msra.mxu0 0.0
    %58 = vmatprep.subr.mxu0 0.0
    %59 = vmatpush1.msra.mxu0 0.0
    %60 = vmatprep.subr.mxu0 0.0
    %61 = vmatpush1.msra.mxu0 %v44
    %62 = vmatprep.subr.mxu0 0.0
    %63 = vmatpush1.msra.mxu0 %v36
    %64 = vmatprep.subr.mxu0 0.0
    %65 = vmatpush1.msra.mxu0 %v35
    %66 = vmatprep.subr.mxu0 0.0
    %67 = vmatpush1.msra.mxu0 %v34
    %68 = vmatprep.subr.mxu0 0.0
    %69 = vmatpush1.msra.mxu0 %v33
    %70 = vmatprep.subr.mxu0 0.0
    %71 = vmatpush1.msra.mxu0 %v32
    %72 = vmatprep.subr.mxu0 0.0
    %73 = vmatpush1.msra.mxu0 %v31
    %74 = vmatprep.subr.mxu0 0.0
    %75 = vmatpush1.msra.mxu0 %v30
    %76 = vmatprep.subr.mxu0 0.0
    %77 = vmatpush1.msra.mxu0 %v29
    %78 = vmatprep.subr.mxu0 0.0
    %79 = vmatpush2.msra.mxu0 0.0
    %80 = vmatprep.subr.mxu0 0.0
    %81 = vmatpush2.msra.mxu0 0.0
    %82 = vmatprep.subr.mxu0 0.0
    %83 = vmatpush2.msra.mxu0 0.0
    %84 = vmatprep.subr.mxu0 0.0
    %85 = vmatpush2.msra.mxu0 0.0
    %86 = vmatprep.subr.mxu0 0.0
    %87 = vmatpush2.msra.mxu0 0.0
    %88 = vmatprep.subr.mxu0 0.0
    %89 = vmatpush2.msra.mxu0 0.0
    %90 = vmatprep.subr.mxu0 0.0
    %91 = vmatpush2.msra.mxu0 0.0
    %92 = vmatprep.subr.mxu0 0.0
    %93 = vmatpush2.msra.mxu0 0.0
    %94 = vmatprep.subr.mxu0 0.0
    %95 = vmatpush2.msra.mxu0 0.0
    %96 = vmatprep.subr.mxu0 0.0
    %97 = vmatpush2.msra.mxu0 0.0
    %98 = vmatprep.subr.mxu0 0.0
    %99 = vmatpush2.msra.mxu0 0.0
    %100 = vmatprep.subr.mxu0 0.0
    %101 = vmatpush2.msra.mxu0 0.0
    %102 = vmatprep.subr.mxu0 0.0
    %103 = vmatpush2.msra.mxu0 0.0
    %104 = vmatprep.subr.mxu0 0.0
    %105 = vmatpush2.msra.mxu0 0.0
    %106 = vmatprep.subr.mxu0 0.0
    %107 = vmatpush2.msra.mxu0 0.0
    %108 = vmatprep.subr.mxu0 0.0
    %109 = vmatpush2.msra.mxu0 0.0
    %110 = vmatprep.mubr.f32.mxu0 0.0
    %111 = vmatmul.mubr.f32.gmra.mxu0 %v40
    %v112 = vpop.f32.mrf.mxu0
    %v113 = vadd.f32 0.0, %v112
    %v114 = vpop.f32.mrf.mxu0
    %115 = vdwg.mxu0
    %v117 = vsel %vm38, %v18, 0
    %v120 = vsel %vm42, %v27, 0
    %122 = vmatprep.subr.mxu0 0.0
    %123 = vmatpush1.msra.mxu0 0.0
    %124 = vmatprep.subr.mxu0 0.0
    %125 = vmatpush1.msra.mxu0 0.0
    %126 = vmatprep.subr.mxu0 0.0
    %127 = vmatpush1.msra.mxu0 0.0
    %128 = vmatprep.subr.mxu0 0.0
    %129 = vmatpush1.msra.mxu0 0.0
    %130 = vmatprep.subr.mxu0 0.0
    %131 = vmatpush1.msra.mxu0 0.0
    %132 = vmatprep.subr.mxu0 0.0
    %133 = vmatpush1.msra.mxu0 0.0
    %134 = vmatprep.subr.mxu0 0.0
    %135 = vmatpush1.msra.mxu0 0.0
    %136 = vmatprep.subr.mxu0 0.0
    %137 = vmatpush1.msra.mxu0 %v120
    %138 = vmatprep.subr.mxu0 0.0
    %139 = vmatpush1.msra.mxu0 %v26
    %140 = vmatprep.subr.mxu0 0.0
    %141 = vmatpush1.msra.mxu0 %v25
    %142 = vmatprep.subr.mxu0 0.0
    %143 = vmatpush1.msra.mxu0 %v24
    %144 = vmatprep.subr.mxu0 0.0
    %145 = vmatpush1.msra.mxu0 %v23
    %146 = vmatprep.subr.mxu0 0.0
    %147 = vmatpush1.msra.mxu0 %v22
    %148 = vmatprep.subr.mxu0 0.0
    %149 = vmatpush1.msra.mxu0 %v21
    %150 = vmatprep.subr.mxu0 0.0
    %151 = vmatpush1.msra.mxu0 %v20
    %152 = vmatprep.subr.mxu0 0.0
    %153 = vmatpush1.msra.mxu0 %v19
    %154 = vmatprep.subr.mxu0 0.0
    %155 = vmatpush2.msra.mxu0 0.0
    %156 = vmatprep.subr.mxu0 0.0
    %157 = vmatpush2.msra.mxu0 0.0
    %158 = vmatprep.subr.mxu0 0.0
    %159 = vmatpush2.msra.mxu0 0.0
    %160 = vmatprep.subr.mxu0 0.0
    %161 = vmatpush2.msra.mxu0 0.0
    %162 = vmatprep.subr.mxu0 0.0
    %163 = vmatpush2.msra.mxu0 0.0
    %164 = vmatprep.subr.mxu0 0.0
    %165 = vmatpush2.msra.mxu0 0.0
    %166 = vmatprep.subr.mxu0 0.0
    %167 = vmatpush2.msra.mxu0 0.0
    %168 = vmatprep.subr.mxu0 0.0
    %169 = vmatpush2.msra.mxu0 0.0
    %170 = vmatprep.subr.mxu0 0.0
    %171 = vmatpush2.msra.mxu0 0.0
    %172 = vmatprep.subr.mxu0 0.0
    %173 = vmatpush2.msra.mxu0 0.0
    %174 = vmatprep.subr.mxu0 0.0
    %175 = vmatpush2.msra.mxu0 0.0
    %176 = vmatprep.subr.mxu0 0.0
    %177 = vmatpush2.msra.mxu0 0.0
    %178 = vmatprep.subr.mxu0 0.0
    %179 = vmatpush2.msra.mxu0 0.0
    %180 = vmatprep.subr.mxu0 0.0
    %181 = vmatpush2.msra.mxu0 0.0
    %182 = vmatprep.subr.mxu0 0.0
    %183 = vmatpush2.msra.mxu0 0.0
    %184 = vmatprep.subr.mxu0 0.0
    %185 = vmatpush2.msra.mxu0 0.0
    %186 = vmatprep.mubr.f32.mxu0 0.0
    %187 = vmatmul.mubr.f32.gmra.mxu0 %v117
    %v188 = vpop.f32.mrf.mxu0
    %v189 = vadd.f32 %v113, %v188
    %v190 = vpop.f32.mrf.mxu0
    %191 = vdwg.mxu0
    %vm192 = vcmask 32768
    %193 = vst.msk [vmem:[#allocation2] sm:$0x1] %vm192, %v189
    // Predicated region
    $region18: #{dual_mm_add.1} parent=1 // pred_check
      _
    $region19: #{dual_mm_add.1} parent=1 // pred_check_branch
      %195 = sbr.rel (0) target = $region21
    $region20: #{dual_mm_add.1} parent=1 // pred_region
      %s197 = ssub.s32 16, 16
      %198 = vsyncadd [#allocation3], %s197
      %s200 = sshll.u32 [#allocation2], 4
      %s201 = int_to_ptr.vmem [resolvable:$true] %s200
      %203 = dma.vmem_to_hbm [thread:$0]  %s201, 16, %s4, [#allocation3]
    $region21: #{dual_mm_add.1} parent=1 // pred_fallthru
      _
    // Predicated region
    $region22: #{dual_mm_add.1} parent=1 // pred_check
      _
    $region23: #{dual_mm_add.1} parent=1 // pred_check_branch
      %205 = sbr.rel (0) target = $region25
    $region24: #{dual_mm_add.1} parent=1 // pred_region
      %206 = dma.done [#allocation3], 16
    $region25: #{dual_mm_add.1} parent=1 // pred_fallthru
      _
    %207 = vsyncpa [#allocation3], 1

</llo_original>
